<compile_context>
chip_gen: v7x
topology: tpu7x:2x2x1
jax: 0.10.0
libtpu: 0.0.40
codegen_flags: <defaults>
</compile_context>

<pallas_src>
import functools

import jax
import jax.numpy as jnp
from jax import lax
from jax.experimental import pallas as pl
from jax.experimental.pallas import tpu as pltpu


def _round_up(x, m):
    return (x + m - 1) // m * m


def _pick_q_tile(n, max_tile=256):
    """Largest multiple-of-8 divisor of n that is <= max_tile (else n)."""
    if n <= max_tile:
        return n
    for t in range(max_tile - max_tile % 8, 7, -8):
        if n % t == 0:
            return t
    return n


# ----------------------------------------------------------------------------
# Kernel 1 & 3: dense layer  y = x @ w + b, tiled over (M, N) with full-K tiles
# ----------------------------------------------------------------------------
def _linear_kernel(x_ref, w_ref, b_ref, o_ref):
    # One MXU pass per output tile (full K resident), f32 accumulation.
    acc = jnp.dot(x_ref[...], w_ref[...], preferred_element_type=jnp.float32)
    o_ref[...] = (acc + b_ref[...].astype(jnp.float32)).astype(o_ref.dtype)


def linear(x2d, w, b, *, tm=256, tn=512):
    """y = x2d @ w + b with a tiled, pipelined Pallas matmul kernel."""
    M, K = x2d.shape
    Kw, N = w.shape
    assert K == Kw and b.shape == (N,)

    tm = min(tm, _round_up(M, 8))      # sublane-aligned row tile
    tn = N if N <= tn else tn          # full N when small, else 128-aligned 512
    b2 = b.reshape(1, N)

    return pl.pallas_call(
        _linear_kernel,
        out_shape=jax.ShapeDtypeStruct((M, N), x2d.dtype),
        grid_spec=pltpu.PrefetchScalarGridSpec(
            num_scalar_prefetch=0,
            grid=(pl.cdiv(M, tm), pl.cdiv(N, tn)),
            in_specs=[
                pl.BlockSpec((tm, K), lambda i, j: (i, 0)),
                pl.BlockSpec((K, tn), lambda i, j: (0, j)),
                pl.BlockSpec((1, tn), lambda i, j: (0, j)),
            ],
            out_specs=pl.BlockSpec((tm, tn), lambda i, j: (i, j)),
        ),
        compiler_params=pltpu.CompilerParams(
            dimension_semantics=("parallel", "parallel"),
            vmem_limit_bytes=64 * 1024 * 1024),
    )(x2d, w, b2)


# ----------------------------------------------------------------------------
# Kernel 2: attention core.  Grid (B, num_q_tiles); the (N, 3C) qkv block stays
# resident across the (inner, fastest) q-tile axis; each head retires its
# output immediately into the lane-dense (tq, C) output block.
# ----------------------------------------------------------------------------
def _attn_kernel(qkv_ref, o_ref, *, num_heads, exp_dtype):
    n, three_c = qkv_ref.shape
    c = three_c // 3
    d = c // num_heads
    tq = o_ref.shape[0]
    q0 = pl.multiple_of(pl.program_id(1) * tq, tq)

    for h in range(num_heads):
        # Softmax scale is already folded into the q columns of qkv_w / qkv_b.
        q = qkv_ref[pl.ds(q0, tq), pl.ds(h * d, d)]                 # (tq, D)
        k = qkv_ref[:, c + h * d:c + (h + 1) * d]                   # (N,  D)
        v = qkv_ref[:, 2 * c + h * d:2 * c + (h + 1) * d]           # (N,  D)

        # q k^T contracting last dims (no explicit transpose), f32 accumulate.
        s = lax.dot_general(q, k, (((1,), (1,)), ((), ())),
                            preferred_element_type=jnp.float32)     # (tq, N)
        m = jnp.max(s, axis=-1, keepdims=True)
        # exp in the compute dtype (bf16 on v6e/v7x, f32 on v5e / f32 path).
        p = jnp.exp((s - m).astype(exp_dtype))
        denom = jnp.sum(p, axis=-1, keepdims=True, dtype=jnp.float32)
        # attn_drop is identity (p = 0.0 / eval mode).
        o_h = jnp.dot(p.astype(v.dtype), v,
                      preferred_element_type=jnp.float32)           # (tq, D)
        o_h = o_h * pl.reciprocal(denom, approx=True)               # EUP vrcp
        # Write this head's slice now (no concat, no H live f32 outputs).
        o_ref[:, h * d:(h + 1) * d] = o_h.astype(o_ref.dtype)


def attention_core(qkv3d, num_heads, *, max_q_tile=256):
    B, N, three_c = qkv3d.shape
    C = three_c // 3
    tq = _pick_q_tile(N, max_q_tile)
    kern = functools.partial(_attn_kernel, num_heads=num_heads,
                             exp_dtype=qkv3d.dtype)
    return pl.pallas_call(
        kern,
        out_shape=jax.ShapeDtypeStruct((B, N, C), qkv3d.dtype),
        grid_spec=pltpu.PrefetchScalarGridSpec(
            num_scalar_prefetch=0,
            grid=(B, N // tq),
            in_specs=[pl.BlockSpec((None, N, three_c), lambda b, i: (b, 0, 0))],
            out_specs=pl.BlockSpec((None, tq, C), lambda b, i: (b, i, 0)),
        ),
        compiler_params=pltpu.CompilerParams(
            dimension_semantics=("parallel", "parallel"),
            vmem_limit_bytes=64 * 1024 * 1024),
    )(qkv3d)


# ----------------------------------------------------------------------------
# Parameter prep (scale folding + dtype) and full forward pass
# ----------------------------------------------------------------------------
def prepare_params(params, num_heads, dtype=jnp.float32):
    """Fold the softmax scale into the q columns of qkv_w/qkv_b; cast weights.

    dtype=jnp.bfloat16 gives bf16 MXU operands / bf16 exp (best on v6e/v7x);
    keep jnp.float32 on v5e.
    """
    C = params["proj_w"].shape[0]
    D = C // num_heads
    scale = D ** (-0.5)
    qkv_w = params["qkv_w"].astype(jnp.float32).at[:, :C].multiply(scale)
    qkv_b = params["qkv_b"].astype(jnp.float32).at[:C].multiply(scale)
    return {
        "qkv_w": qkv_w.astype(dtype),
        "qkv_b": qkv_b.astype(dtype),
        "proj_w": params["proj_w"].astype(dtype),
        "proj_b": params["proj_b"].astype(dtype),
    }


def attention3d_forward(x, prepared, num_heads):
    B, N, C = x.shape
    dtype = prepared["qkv_w"].dtype
    x2d = x.astype(dtype).reshape(B * N, C)

    # qkv = self.qkv(x)  (scale pre-folded into the q columns)
    qkv = linear(x2d, prepared["qkv_w"], prepared["qkv_b"])        # (B*N, 3C)
    qkv = qkv.reshape(B, N, 3 * C)                                 # free reshape

    # softmax(q k^T * scale) @ v, heads handled in-kernel, output (B, N, C)
    o = attention_core(qkv, num_heads)                             # (B, N, C)

    # x = self.proj(x); proj_drop is identity
    out = linear(o.reshape(B * N, C), prepared["proj_w"], prepared["proj_b"])
    return out.reshape(B, N, C)


# ----------------------------------------------------------------------------
# Pure-JAX reference for correctness check
# ----------------------------------------------------------------------------
def attention3d_ref(x, params, num_heads):
    B, N, C = x.shape
    D = C // num_heads
    scale = D ** (-0.5)
    qkv = x @ params["qkv_w"] + params["qkv_b"]
    qkv = qkv.reshape(B, N, 3, num_heads, D).transpose(2, 0, 3, 1, 4)
    q, k, v = qkv[0], qkv[1], qkv[2]
    attn = jnp.einsum("bhqd,bhkd->bhqk", q, k) * scale
    attn = jax.nn.softmax(attn, axis=-1)
    o = jnp.einsum("bhqk,bhkd->bhqd", attn, v)
    o = o.transpose(0, 2, 1, 3).reshape(B, N, C)
    return o @ params["proj_w"] + params["proj_b"]


if __name__ == "__main__":
    # Small, module-consistent shapes: dim divisible by num_heads.
    B, N, C = 2, 8, 32
    num_heads = 4

    key = jax.random.PRNGKey(0)
    kx, k1, k2, k3, k4 = jax.random.split(key, 5)

    x = jax.random.normal(kx, (B, N, C), dtype=jnp.float32)

    # Same shapes as nn.Linear(dim, 3*dim) / nn.Linear(dim, dim); stored as
    # (in, out) so forward is x @ w + b.
    params = {
        "qkv_w": jax.random.normal(k1, (C, 3 * C), dtype=jnp.float32) * 0.02,
        "qkv_b": jax.random.normal(k2, (3 * C,), dtype=jnp.float32) * 0.02,
        "proj_w": jax.random.normal(k3, (C, C), dtype=jnp.float32) * 0.02,
        "proj_b": jax.random.normal(k4, (C,), dtype=jnp.float32) * 0.02,
    }

    ref = attention3d_ref(x, params, num_heads)

    # f32 operand path (tight logic check; this is also the v5e-preferred mode).
    out_f32 = attention3d_forward(
        x, prepare_params(params, num_heads, jnp.float32), num_heads)
    out_f32 = jax.block_until_ready(out_f32)
    assert out_f32.shape == (B, N, C)
    err32 = float(jnp.max(jnp.abs(out_f32 - ref)))
    assert jnp.allclose(out_f32, ref, atol=2e-3, rtol=2e-3), err32

    # bf16 MXU-operand path (recommended on v6e / v7x); looser tolerance.
    out_bf16 = attention3d_forward(
        x, prepare_params(params, num_heads, jnp.bfloat16), num_heads)
    out_bf16 = jax.block_until_ready(out_bf16).astype(jnp.float32)
    err16 = float(jnp.max(jnp.abs(out_bf16 - ref)))
    assert jnp.allclose(out_bf16, ref, atol=2e-2, rtol=5e-2), err16

    print("KERNEL_OK")
</pallas_src>

<mosaic_0001>
module attributes {stable_mosaic.version = 11 : i64} {
  func.func @_linear_kernel(%arg0: i32, %arg1: i32, %arg2: memref<16x32xf32, #tpu.memory_space<vmem>>, %arg3: memref<32x96xf32, #tpu.memory_space<vmem>>, %arg4: memref<1x96xf32, #tpu.memory_space<vmem>>, %arg5: memref<16x96xf32, #tpu.memory_space<vmem>>) attributes {dimension_semantics = [#tpu.dimension_semantics<parallel>, #tpu.dimension_semantics<parallel>], iteration_bounds = array<i64: 1, 1>, scalar_prefetch = 0 : i64, scratch_operands = 0 : i64, tpu.core_type = #tpu.core_type<tc>, window_params = [{transform_indices = @transform_0, window_bounds = array<i64: 16, 32>}, {transform_indices = @transform_1, window_bounds = array<i64: 32, 96>}, {transform_indices = @transform_2, window_bounds = array<i64: 1, 96>}, {transform_indices = @transform_3, window_bounds = array<i64: 16, 96>}]} {
    %c0 = arith.constant 0 : index
    %c0_0 = arith.constant 0 : index
    %0 = vector.load %arg2[%c0, %c0_0] : memref<16x32xf32, #tpu.memory_space<vmem>>, vector<16x32xf32>
    %c0_1 = arith.constant 0 : index
    %c0_2 = arith.constant 0 : index
    %1 = vector.load %arg3[%c0_1, %c0_2] : memref<32x96xf32, #tpu.memory_space<vmem>>, vector<32x96xf32>
    %cst = arith.constant dense<0.000000e+00> : vector<16x96xf32>
    %2 = tpu.matmul %0, %1, %cst {dimension_numbers = #tpu.dot_dimension_numbers<[1], [0], [0], [1], [0, 0, 1, 1], [], []>} : vector<16x32xf32>, vector<32x96xf32>, vector<16x96xf32> -> vector<16x96xf32>
    %c0_3 = arith.constant 0 : index
    %c0_4 = arith.constant 0 : index
    %3 = vector.load %arg4[%c0_3, %c0_4] : memref<1x96xf32, #tpu.memory_space<vmem>>, vector<1x96xf32>
    %4 = vector.broadcast %3 : vector<1x96xf32> to vector<16x96xf32>
    %5 = arith.addf %2, %4 : vector<16x96xf32>
    %c0_5 = arith.constant 0 : index
    %c0_6 = arith.constant 0 : index
    %6 = vector.load %arg5[%c0_5, %c0_6] : memref<16x96xf32, #tpu.memory_space<vmem>>, vector<16x96xf32>
    tpu.vector_store %arg5[%c0_5, %c0_6], %5 {strides = array<i32>} : memref<16x96xf32, #tpu.memory_space<vmem>>, vector<16x96xf32>,
    return
  }
  func.func @transform_0(%arg0: i32, %arg1: i32) -> (i32, i32) {
    %c0_i32 = arith.constant 0 : i32
    %c0_i32_0 = arith.constant 0 : i32
    return %arg0, %c0_i32 : i32, i32
  }
  func.func @transform_1(%arg0: i32, %arg1: i32) -> (i32, i32) {
    %c0_i32 = arith.constant 0 : i32
    %c0_i32_0 = arith.constant 0 : i32
    return %c0_i32, %arg1 : i32, i32
  }
  func.func @transform_2(%arg0: i32, %arg1: i32) -> (i32, i32) {
    %c0_i32 = arith.constant 0 : i32
    %c0_i32_0 = arith.constant 0 : i32
    return %c0_i32, %arg1 : i32, i32
  }
  func.func @transform_3(%arg0: i32, %arg1: i32) -> (i32, i32) {
    %c0_i32 = arith.constant 0 : i32
    return %arg0, %arg1 : i32, i32
  }
}

</mosaic_0001>

<llo_original>
// kernel: tpu_custom_call.1
$region0: #{tpu_custom_call.1}
  #allocation0 [shape = 'u32[]', space=smem, size = 0x4, offset = 0x4, fixed_abs, tag = 'smem constant byte address 0x4 - core index']
  #allocation1 [shape = 'u32[144,128]{1,0:T(1,128)}', space=vmem, size = 0x12000, scoped, tag = 'internal scratch']
  %s0 = inlined_call_operand.hbm [shape: f32[16,32], index: 0, kind: input, shape index: {}]
  %s1 = inlined_call_operand.hbm [shape: f32[32,96], index: 1, kind: input, shape index: {}]
  %s2 = inlined_call_operand.hbm [shape: f32[1,96], index: 2, kind: input, shape index: {}]
  %s3 = inlined_call_operand.hbm [shape: f32[16,96], index: 3, kind: output, shape index: {}]
  %s4 = sld [smem:[#allocation0]]
  $region34: #{tpu_custom_call.1} parent=0
    _
  %s6 = ssub.s32 1, %s4
  %s7 = scalar_select 0, %s6, %s4
  $region1: #{tpu_custom_call.1} parent=0
    #allocation2 [shape = 'u8[8192]{0}', space=vmem, size = 0x2000, scoped, tag = 'input window, operand 0, single buffered']
    #allocation3 [shape = 's32[1]{0}', space=sflag, size = 0x4, scoped, tag = 'scoped memory for tpu_custom_call.1']
    #allocation4 [shape = 's32[1]{0}', space=sflag, size = 0x4, scoped, tag = 'scoped memory for tpu_custom_call.1']
    #allocation5 [shape = 'u8[16384]{0}', space=vmem, size = 0x4000, scoped, tag = 'input window, operand 1, single buffered']
    #allocation6 [shape = 's32[1]{0}', space=sflag, size = 0x4, scoped, tag = 'scoped memory for tpu_custom_call.1']
    #allocation7 [shape = 'u8[512]{0}', space=vmem, size = 0x400, scoped, tag = 'input window, operand 2, single buffered']
    #allocation8 [shape = 'u8[8192]{0}', space=vmem, size = 0x2000, scoped, tag = 'output window, operand 0, single buffered']
    %8 = vsyncpa [#allocation3], 0
    %9 = vsyncpa [#allocation6], 0
    %10 = vsyncpa [#allocation4], 0
    // Predicated region
    $region2: #{tpu_custom_call.1} parent=1 // pred_check
      _
    $region3: #{tpu_custom_call.1} parent=1 // pred_check_branch
      %12 = sbr.rel (0) target = $region5
    $region4: #{tpu_custom_call.1} parent=1 // pred_region
      %s14 = ssub.s32 256, 256
      %15 = vsyncadd [#allocation3], %s14
      %s16 = sshll.u32 [#allocation2], 4
      %s17 = int_to_ptr.vmem [resolvable:$true] %s16
      %22 = dma.hbm_to_vmem [thread:$0]  %s0, 256, %s17, [#allocation3], 128, 128, 8
    $region5: #{tpu_custom_call.1} parent=1 // pred_fallthru
      _
    // Predicated region
    $region6: #{tpu_custom_call.1} parent=1 // pred_check
      _
    $region7: #{tpu_custom_call.1} parent=1 // pred_check_branch
      %24 = sbr.rel (0) target = $region9
    $region8: #{tpu_custom_call.1} parent=1 // pred_region
      %s26 = ssub.s32 512, 512
      %27 = vsyncadd [#allocation6], %s26
      %s28 = sshll.u32 [#allocation5], 4
      %s29 = int_to_ptr.vmem [resolvable:$true] %s28
      %34 = dma.hbm_to_vmem [thread:$0]  %s1, 512, %s29, [#allocation6], 128, 128, 8
    $region9: #{tpu_custom_call.1} parent=1 // pred_fallthru
      _
    // Predicated region
    $region10: #{tpu_custom_call.1} parent=1 // pred_check
      _
    $region11: #{tpu_custom_call.1} parent=1 // pred_check_branch
      %36 = sbr.rel (0) target = $region13
    $region12: #{tpu_custom_call.1} parent=1 // pred_region
      %s38 = ssub.s32 16, 16
      %39 = vsyncadd [#allocation6], %s38
      %s41 = sshll.u32 [#allocation7], 4
      %s42 = int_to_ptr.vmem [resolvable:$true] %s41
      %44 = dma.hbm_to_vmem [thread:$0]  %s2, 16, %s42, [#allocation6]
    $region13: #{tpu_custom_call.1} parent=1 // pred_fallthru
      _
    // Predicated region
    $region14: #{tpu_custom_call.1} parent=1 // pred_check
      _
    $region15: #{tpu_custom_call.1} parent=1 // pred_check_branch
      %46 = sbr.rel (0) target = $region17
    $region16: #{tpu_custom_call.1} parent=1 // pred_region
      %47 = dma.done [#allocation3], 256
    $region17: #{tpu_custom_call.1} parent=1 // pred_fallthru
      _
    // Predicated region
    $region18: #{tpu_custom_call.1} parent=1 // pred_check
      _
    $region19: #{tpu_custom_call.1} parent=1 // pred_check_branch
      %49 = sbr.rel (0) target = $region21
    $region20: #{tpu_custom_call.1} parent=1 // pred_region
      %50 = dma.done [#allocation6], 512
    $region21: #{tpu_custom_call.1} parent=1 // pred_fallthru
      _
    // Predicated region
    $region22: #{tpu_custom_call.1} parent=1 // pred_check
      _
    $region23: #{tpu_custom_call.1} parent=1 // pred_check_branch
      %52 = sbr.rel (0) target = $region25
    $region24: #{tpu_custom_call.1} parent=1 // pred_region
      %53 = dma.done [#allocation6], 16
    $region25: #{tpu_custom_call.1} parent=1 // pred_fallthru
      _
    %v54 = vld [vmem:[#allocation2] sm:$0xff]
    %v55 = vld [vmem:[#allocation2 + $0x8] sm:$0xff]
    %v56 = vld [vmem:[#allocation5] sm:$0xff]
    %v57 = vld [vmem:[#allocation5 + $0x8] sm:$0xff]
    %v58 = vld [vmem:[#allocation5 + $0x10] sm:$0xff]
    %v59 = vld [vmem:[#allocation5 + $0x18] sm:$0xff]
    %v60 = vld [vmem:[#allocation7] sm:$0x1]
    %v62 = vlaneseq
    %v63 = vshrl.u32 %v62, 7
    %v64 = vsub.s32 0, %v63
    %v65 = vrot.slane %v60, %v64
    %vm67 = vcmask 261120
    %v69 = vsel %vm67, %v54, 0
    %v72 = vsel %vm67, %v55, 0
    %74 = vmatprep.subr.mxu0 0.0
    %75 = vmatpush1.msra.mxu0 %v56
    %76 = vmatprep.subr.mxu0 0.0
    %77 = vmatpush1.msra.mxu0 %v57
    %78 = vmatprep.subr.mxu0 0.0
    %79 = vmatpush1.msra.mxu0 %v58
    %80 = vmatprep.subr.mxu0 0.0
    %81 = vmatpush1.msra.mxu0 %v59
    %82 = vmatprep.subr.mxu0 0.0
    %83 = vmatpush1.msra.mxu0 0.0
    %84 = vmatprep.subr.mxu0 0.0
    %85 = vmatpush1.msra.mxu0 0.0
    %86 = vmatprep.subr.mxu0 0.0
    %87 = vmatpush1.msra.mxu0 0.0
    %88 = vmatprep.subr.mxu0 0.0
    %89 = vmatpush1.msra.mxu0 0.0
    %90 = vmatprep.subr.mxu0 0.0
    %91 = vmatpush1.msra.mxu0 0.0
    %92 = vmatprep.subr.mxu0 0.0
    %93 = vmatpush1.msra.mxu0 0.0
    %94 = vmatprep.subr.mxu0 0.0
    %95 = vmatpush1.msra.mxu0 0.0
    %96 = vmatprep.subr.mxu0 0.0
    %97 = vmatpush1.msra.mxu0 0.0
    %98 = vmatprep.subr.mxu0 0.0
    %99 = vmatpush1.msra.mxu0 0.0
    %100 = vmatprep.subr.mxu0 0.0
    %101 = vmatpush1.msra.mxu0 0.0
    %102 = vmatprep.subr.mxu0 0.0
    %103 = vmatpush1.msra.mxu0 0.0
    %104 = vmatprep.subr.mxu0 0.0
    %105 = vmatpush1.msra.mxu0 0.0
    %106 = vmatprep.subr.mxu0 0.0
    %107 = vmatpush1.msra.mxu0 0.0
    %108 = vmatprep.subr.mxu0 0.0
    %109 = vmatpush1.msra.mxu0 0.0
    %110 = vmatprep.subr.mxu0 0.0
    %111 = vmatpush1.msra.mxu0 0.0
    %112 = vmatprep.subr.mxu0 0.0
    %113 = vmatpush1.msra.mxu0 0.0
    %114 = vmatprep.subr.mxu0 0.0
    %115 = vmatpush1.msra.mxu0 0.0
    %116 = vmatprep.subr.mxu0 0.0
    %117 = vmatpush1.msra.mxu0 0.0
    %118 = vmatprep.subr.mxu0 0.0
    %119 = vmatpush1.msra.mxu0 0.0
    %120 = vmatprep.subr.mxu0 0.0
    %121 = vmatpush1.msra.mxu0 0.0
    %122 = vmatprep.subr.mxu0 0.0
    %123 = vmatpush1.msra.mxu0 0.0
    %124 = vmatprep.subr.mxu0 0.0
    %125 = vmatpush1.msra.mxu0 0.0
    %126 = vmatprep.subr.mxu0 0.0
    %127 = vmatpush1.msra.mxu0 0.0
    %128 = vmatprep.subr.mxu0 0.0
    %129 = vmatpush1.msra.mxu0 0.0
    %130 = vmatprep.subr.mxu0 0.0
    %131 = vmatpush1.msra.mxu0 0.0
    %132 = vmatprep.subr.mxu0 0.0
    %133 = vmatpush1.msra.mxu0 0.0
    %134 = vmatprep.subr.mxu0 0.0
    %135 = vmatpush1.msra.mxu0 0.0
    %136 = vmatprep.subr.mxu0 0.0
    %137 = vmatpush1.msra.mxu0 0.0
    %138 = vmatprep.mubr.f32.mxu0 0.0
    %139 = vmatmul.mubr.f32.gmra.mrb[0].mxu0 %v69
    %v140 = vpop.f32.mrb[0].mxu0
    %v141 = vadd.f32 %v65, %v140
    %v142 = vpop.f32.mrb[0].mxu0
    %143 = vmatprep.mubr.f32.mxu0 0.0
    %144 = vmatmul.mubr.f32.gmra.mrb[0].mxu0 %v72
    %v145 = vpop.f32.mrb[0].mxu0
    %v146 = vadd.f32 %v65, %v145
    %v147 = vpop.f32.mrb[0].mxu0
    %148 = vdwg.mxu0
    %vm149 = vcmask 785408
    %150 = vst.msk [vmem:[#allocation8] sm:$0xff] %vm149, %v141
    %151 = vst.msk [vmem:[#allocation8 + $0x8] sm:$0xff] %vm149, %v146
    // Predicated region
    $region26: #{tpu_custom_call.1} parent=1 // pred_check
      _
    $region27: #{tpu_custom_call.1} parent=1 // pred_check_branch
      %153 = sbr.rel (0) target = $region29
    $region28: #{tpu_custom_call.1} parent=1 // pred_region
      %s155 = ssub.s32 256, 256
      %156 = vsyncadd [#allocation4], %s155
      %s157 = sshll.u32 [#allocation8], 4
      %s158 = int_to_ptr.vmem [resolvable:$true] %s157
      %163 = dma.vmem_to_hbm [thread:$0]  %s158, 256, %s3, [#allocation4], 128, 128, 8
    $region29: #{tpu_custom_call.1} parent=1 // pred_fallthru
      _
    // Predicated region
    $region30: #{tpu_custom_call.1} parent=1 // pred_check
      _
    $region31: #{tpu_custom_call.1} parent=1 // pred_check_branch
      %165 = sbr.rel (0) target = $region33
    $region32: #{tpu_custom_call.1} parent=1 // pred_region
      %166 = dma.done [#allocation4], 256
    $region33: #{tpu_custom_call.1} parent=1 // pred_fallthru
      _
    %167 = vsyncpa [#allocation3], 1
    %168 = vsyncpa [#allocation6], 1
    %169 = vsyncpa [#allocation4], 1

</llo_original>
